<compile_context>
chip_gen: v5e
topology: v5e:2x2
jax: 0.10.0
libtpu: 0.0.40
codegen_flags: <defaults>
</compile_context>

<pallas_src>
import jax
import jax.numpy as jnp
from jax.experimental import pallas as pl
from jax.experimental.pallas import tpu as pltpu


def _round_up(a, m):
    return ((a + m - 1) // m) * m


def mlp_bn_kernel(x_ref, w1_ref, b1_ref, w2_ref, b2_ref, w3_ref, b3_ref, o_ref):
    # Layer 1: cast the f32 x tile to bf16 in VMEM (VPU, free slack) so the
    # dominant matmul runs as a single bf16 MXU pass; accumulate in f32.
    x_bf = x_ref[...].astype(jnp.bfloat16)
    h = jnp.dot(x_bf, w1_ref[...], preferred_element_type=jnp.float32)
    h = jnp.maximum(h + b1_ref[...], 0.0)
    # Layer 2: (TM, 64) @ (64, 32) + b2, ReLU  (tiny, kept f32)
    h = jnp.dot(h, w2_ref[...], preferred_element_type=jnp.float32)
    h = jnp.maximum(h + b2_ref[...], 0.0)
    # Layer 3: (TM, 32) @ (32, num_classes) + b3
    out = jnp.dot(h, w3_ref[...], preferred_element_type=jnp.float32)
    o_ref[...] = (out + b3_ref[...]).astype(o_ref.dtype)


def _choose_tm(B, size):
    """Pick the batch-tile height.

    - Keep 2x (double-buffered) f32 x tiles well inside the scoped-VMEM budget
      of the tightest generation (v7x: 32 MiB scoped / 64 MiB physical).
    - Prefer large tiles (streaming, memory-bound kernel), but for small and
      moderate batches keep >= 2 balanced tiles so v7x's two TensorCores are
      both used via the "parallel" batch axis.
    """
    vmem_budget = 16 * 1024 * 1024  # for the double-buffered f32 x tile only
    tm_cap = max(8, ((vmem_budget // (2 * 4 * max(size, 1))) // 8) * 8)
    tm_target = min(1024, tm_cap)
    if B < 16:
        return B                       # single whole-array tile, no padding
    if B <= 2 * tm_target:
        return _round_up(pl.cdiv(B, 2), 8)   # two (nearly) balanced tiles
    return tm_target


def mlp_bn_forward(x, params):
    """x: (B, C, H, W) float32. params: prepared dict (w1 bf16, rest f32,
    weights stored (in, out), biases (1, out))."""
    B = x.shape[0]
    size = 1
    for d in x.shape[1:]:
        size *= d
    x_flat = x.reshape(B, size)  # nn.Flatten (bitcast-free reshape inside jit)

    w1, b1 = params["w1"], params["b1"]
    w2, b2 = params["w2"], params["b2"]
    w3, b3 = params["w3"], params["b3"]
    num_classes = w3.shape[1]

    TM = _choose_tm(B, size)
    n_tiles = pl.cdiv(B, TM)

    const_spec = lambda a: pl.BlockSpec(a.shape, lambda i: (0, 0))

    flops = 2 * B * (size * 64 + 64 * 32 + 32 * num_classes)
    bytes_accessed = (
        B * size * 4                      # x read (f32, single HBM pass)
        + w1.size * 2                     # bf16 weights
        + (w2.size + w3.size + b1.size + b2.size + b3.size) * 4
        + B * num_classes * 4             # output writeback
    )

    out = pl.pallas_call(
        mlp_bn_kernel,
        out_shape=jax.ShapeDtypeStruct((B, num_classes), jnp.float32),
        grid_spec=pltpu.PrefetchScalarGridSpec(
            num_scalar_prefetch=0,
            grid=(n_tiles,),
            in_specs=[
                pl.BlockSpec((TM, size), lambda i: (i, 0)),   # x tile streams
                const_spec(w1), const_spec(b1),               # weights resident
                const_spec(w2), const_spec(b2),
                const_spec(w3), const_spec(b3),
            ],
            out_specs=pl.BlockSpec((TM, num_classes), lambda i: (i, 0)),
        ),
        compiler_params=pltpu.CompilerParams(
            dimension_semantics=("parallel",),
        ),
        cost_estimate=pl.CostEstimate(
            flops=flops, transcendentals=0, bytes_accessed=bytes_accessed),
    )(x_flat, w1, b1, w2, b2, w3, b3)

    return out


def init_params(key, size, num_classes=10):
    """Deterministic Kaiming-uniform-style init matching nn.Linear shapes (f32)."""
    dims = [(size, 64), (64, 32), (32, num_classes)]
    params = {}
    for i, (fan_in, fan_out) in enumerate(dims, start=1):
        key, kw, kb = jax.random.split(key, 3)
        bound = 1.0 / jnp.sqrt(fan_in)
        # stored as (in, out) = transpose of PyTorch (out, in)
        params[f"w{i}"] = jax.random.uniform(
            kw, (fan_in, fan_out), jnp.float32, -bound, bound)
        params[f"b{i}"] = jax.random.uniform(
            kb, (1, fan_out), jnp.float32, -bound, bound)
    return params


def prepare_params(params):
    """One-time param prep: cast the large layer-1 weight to bf16 so the
    per-call forward contains no standalone cast/pad HLO ops."""
    p = dict(params)
    p["w1"] = params["w1"].astype(jnp.bfloat16)
    return p


if __name__ == "__main__":
    key = jax.random.PRNGKey(0)
    kx, kp = jax.random.split(key)

    # input_shape = (4, 16, 16) -> size = 1024, num_classes = 10
    B, C, H, W = 2, 4, 16, 16
    x = jax.random.normal(kx, (B, C, H, W), jnp.float32)
    params = init_params(kp, C * H * W, num_classes=10)
    kparams = prepare_params(params)

    fwd = jax.jit(mlp_bn_forward)
    out = fwd(x, kparams)
    out = jax.block_until_ready(out)

    # sanity check vs plain-JAX reference (same bf16 cast for layer 1)
    xf = x.reshape(B, -1)
    ref = jnp.dot(xf.astype(jnp.bfloat16), params["w1"].astype(jnp.bfloat16),
                  preferred_element_type=jnp.float32)
    ref = jnp.maximum(ref + params["b1"], 0.0)
    ref = jnp.maximum(ref @ params["w2"] + params["b2"], 0.0)
    ref = ref @ params["w3"] + params["b3"]
    assert out.shape == (B, 10)
    assert jnp.allclose(out, ref, atol=1e-2, rtol=1e-2), (
        jnp.max(jnp.abs(out - ref)))

    print("KERNEL_OK")
</pallas_src>

<mosaic_0001>
module attributes {stable_mosaic.version = 11 : i64} {
  func.func @mlp_bn_kernel(%arg0: i32, %arg1: memref<2x1024xf32, #tpu.memory_space<vmem>>, %arg2: memref<1024x64xbf16, #tpu.memory_space<vmem>>, %arg3: memref<1x64xf32, #tpu.memory_space<vmem>>, %arg4: memref<64x32xf32, #tpu.memory_space<vmem>>, %arg5: memref<1x32xf32, #tpu.memory_space<vmem>>, %arg6: memref<32x10xf32, #tpu.memory_space<vmem>>, %arg7: memref<1x10xf32, #tpu.memory_space<vmem>>, %arg8: memref<2x10xf32, #tpu.memory_space<vmem>>) attributes {dimension_semantics = [#tpu.dimension_semantics<parallel>], iteration_bounds = array<i64: 1>, scalar_prefetch = 0 : i64, scratch_operands = 0 : i64, tpu.core_type = #tpu.core_type<tc>, window_params = [{transform_indices = @transform_0, window_bounds = array<i64: 2, 1024>}, {pipeline_mode = #tpu.pipeline_mode<synchronous>, transform_indices = @transform_1, window_bounds = array<i64: 1024, 64>}, {pipeline_mode = #tpu.pipeline_mode<synchronous>, transform_indices = @transform_2, window_bounds = array<i64: 1, 64>}, {pipeline_mode = #tpu.pipeline_mode<synchronous>, transform_indices = @transform_3, window_bounds = array<i64: 64, 32>}, {pipeline_mode = #tpu.pipeline_mode<synchronous>, transform_indices = @transform_4, window_bounds = array<i64: 1, 32>}, {pipeline_mode = #tpu.pipeline_mode<synchronous>, transform_indices = @transform_5, window_bounds = array<i64: 32, 10>}, {pipeline_mode = #tpu.pipeline_mode<synchronous>, transform_indices = @transform_6, window_bounds = array<i64: 1, 10>}, {transform_indices = @transform_7, window_bounds = array<i64: 2, 10>}]} {
    %c0 = arith.constant 0 : index
    %c0_0 = arith.constant 0 : index
    %0 = vector.load %arg1[%c0, %c0_0] : memref<2x1024xf32, #tpu.memory_space<vmem>>, vector<2x1024xf32>
    %1 = arith.truncf %0 : vector<2x1024xf32> to vector<2x1024xbf16>
    %c0_1 = arith.constant 0 : index
    %c0_2 = arith.constant 0 : index
    %2 = vector.load %arg2[%c0_1, %c0_2] : memref<1024x64xbf16, #tpu.memory_space<vmem>>, vector<1024x64xbf16>
    %cst = arith.constant dense<0.000000e+00> : vector<2x64xf32>
    %3 = tpu.matmul %1, %2, %cst {dimension_numbers = #tpu.dot_dimension_numbers<[1], [0], [0], [1], [0, 0, 1, 1], [], []>} : vector<2x1024xbf16>, vector<1024x64xbf16>, vector<2x64xf32> -> vector<2x64xf32>
    %c0_3 = arith.constant 0 : index
    %c0_4 = arith.constant 0 : index
    %4 = vector.load %arg3[%c0_3, %c0_4] : memref<1x64xf32, #tpu.memory_space<vmem>>, vector<1x64xf32>
    %5 = vector.broadcast %4 : vector<1x64xf32> to vector<2x64xf32>
    %6 = arith.addf %3, %5 : vector<2x64xf32>
    %cst_5 = arith.constant 0.000000e+00 : f32
    %7 = vector.broadcast %cst_5 : f32 to vector<2x64xf32>
    %8 = arith.maximumf %6, %7 : vector<2x64xf32>
    %c0_6 = arith.constant 0 : index
    %c0_7 = arith.constant 0 : index
    %9 = vector.load %arg4[%c0_6, %c0_7] : memref<64x32xf32, #tpu.memory_space<vmem>>, vector<64x32xf32>
    %cst_8 = arith.constant dense<0.000000e+00> : vector<2x32xf32>
    %10 = tpu.matmul %8, %9, %cst_8 {dimension_numbers = #tpu.dot_dimension_numbers<[1], [0], [0], [1], [0, 0, 1, 1], [], []>} : vector<2x64xf32>, vector<64x32xf32>, vector<2x32xf32> -> vector<2x32xf32>
    %c0_9 = arith.constant 0 : index
    %c0_10 = arith.constant 0 : index
    %11 = vector.load %arg5[%c0_9, %c0_10] : memref<1x32xf32, #tpu.memory_space<vmem>>, vector<1x32xf32>
    %12 = vector.broadcast %11 : vector<1x32xf32> to vector<2x32xf32>
    %13 = arith.addf %10, %12 : vector<2x32xf32>
    %cst_11 = arith.constant 0.000000e+00 : f32
    %14 = vector.broadcast %cst_11 : f32 to vector<2x32xf32>
    %15 = arith.maximumf %13, %14 : vector<2x32xf32>
    %c0_12 = arith.constant 0 : index
    %c0_13 = arith.constant 0 : index
    %16 = vector.load %arg6[%c0_12, %c0_13] : memref<32x10xf32, #tpu.memory_space<vmem>>, vector<32x10xf32>
    %cst_14 = arith.constant dense<0.000000e+00> : vector<2x10xf32>
    %17 = tpu.matmul %15, %16, %cst_14 {dimension_numbers = #tpu.dot_dimension_numbers<[1], [0], [0], [1], [0, 0, 1, 1], [], []>} : vector<2x32xf32>, vector<32x10xf32>, vector<2x10xf32> -> vector<2x10xf32>
    %c0_15 = arith.constant 0 : index
    %c0_16 = arith.constant 0 : index
    %18 = vector.load %arg7[%c0_15, %c0_16] : memref<1x10xf32, #tpu.memory_space<vmem>>, vector<1x10xf32>
    %19 = vector.broadcast %18 : vector<1x10xf32> to vector<2x10xf32>
    %20 = arith.addf %17, %19 : vector<2x10xf32>
    %c0_17 = arith.constant 0 : index
    %c0_18 = arith.constant 0 : index
    %21 = vector.load %arg8[%c0_17, %c0_18] : memref<2x10xf32, #tpu.memory_space<vmem>>, vector<2x10xf32>
    tpu.vector_store %arg8[%c0_17, %c0_18], %20 {strides = array<i32>} : memref<2x10xf32, #tpu.memory_space<vmem>>, vector<2x10xf32>,
    return
  }
  func.func @transform_0(%arg0: i32) -> (i32, i32) {
    %c0_i32 = arith.constant 0 : i32
    %c0_i32_0 = arith.constant 0 : i32
    return %arg0, %c0_i32 : i32, i32
  }
  func.func @transform_1(%arg0: i32) -> (i32, i32) {
    %c0_i32 = arith.constant 0 : i32
    %c0_i32_0 = arith.constant 0 : i32
    %c0_i32_1 = arith.constant 0 : i32
    return %c0_i32, %c0_i32_0 : i32, i32
  }
  func.func @transform_2(%arg0: i32) -> (i32, i32) {
    %c0_i32 = arith.constant 0 : i32
    %c0_i32_0 = arith.constant 0 : i32
    %c0_i32_1 = arith.constant 0 : i32
    return %c0_i32, %c0_i32_0 : i32, i32
  }
  func.func @transform_3(%arg0: i32) -> (i32, i32) {
    %c0_i32 = arith.constant 0 : i32
    %c0_i32_0 = arith.constant 0 : i32
    %c0_i32_1 = arith.constant 0 : i32
    return %c0_i32, %c0_i32_0 : i32, i32
  }
  func.func @transform_4(%arg0: i32) -> (i32, i32) {
    %c0_i32 = arith.constant 0 : i32
    %c0_i32_0 = arith.constant 0 : i32
    %c0_i32_1 = arith.constant 0 : i32
    return %c0_i32, %c0_i32_0 : i32, i32
  }
  func.func @transform_5(%arg0: i32) -> (i32, i32) {
    %c0_i32 = arith.constant 0 : i32
    %c0_i32_0 = arith.constant 0 : i32
    %c0_i32_1 = arith.constant 0 : i32
    return %c0_i32, %c0_i32_0 : i32, i32
  }
  func.func @transform_6(%arg0: i32) -> (i32, i32) {
    %c0_i32 = arith.constant 0 : i32
    %c0_i32_0 = arith.constant 0 : i32
    %c0_i32_1 = arith.constant 0 : i32
    return %c0_i32, %c0_i32_0 : i32, i32
  }
  func.func @transform_7(%arg0: i32) -> (i32, i32) {
    %c0_i32 = arith.constant 0 : i32
    %c0_i32_0 = arith.constant 0 : i32
    return %arg0, %c0_i32 : i32, i32
  }
}

</mosaic_0001>

<llo_original>
// kernel: mlp_bn_forward.1
$region0: #{mlp_bn_forward.1}
  #allocation0 [shape = 'u32[]', space=smem, size = 0x4, offset = 0x4, fixed_abs, tag = 'smem constant byte address 0x4 - core index']
  #allocation1 [shape = 'u32[72,128]{1,0:T(1,128)}', space=vmem, size = 0x9000, scoped, tag = 'internal scratch']
  %s0 = inlined_call_operand.vmem [shape: f32[2,1024], index: 0, kind: input, shape index: {}]
  %s1 = inlined_call_operand.vmem [shape: bf16[1024,64], index: 1, kind: input, shape index: {}]
  %s2 = inlined_call_operand.vmem [shape: f32[1,64], index: 2, kind: input, shape index: {}]
  %s3 = inlined_call_operand.vmem [shape: f32[64,32], index: 3, kind: input, shape index: {}]
  %s4 = inlined_call_operand.vmem [shape: f32[1,32], index: 4, kind: input, shape index: {}]
  %s5 = inlined_call_operand.vmem [shape: f32[32,10], index: 5, kind: input, shape index: {}]
  %s6 = inlined_call_operand.vmem [shape: f32[1,10], index: 6, kind: input, shape index: {}]
  %s7 = inlined_call_operand.hbm [shape: f32[2,10], index: 7, kind: output, shape index: {}]
  %s8 = sld [smem:[#allocation0]]
  $region38: #{mlp_bn_forward.1} parent=0
    _
  %s10 = ssub.s32 1, %s8
  %s11 = scalar_select 0, %s10, %s8
  $region1: #{mlp_bn_forward.1} parent=0
    #allocation2 [shape = 'u8[1024]{0}', space=vmem, size = 0x400, scoped, tag = 'output window, operand 0, single buffered']
    #allocation3 [shape = 's32[1]{0}', space=sflag, size = 0x4, scoped, tag = 'scoped memory for mlp_bn_forward.1']
    %12 = vsyncpa [#allocation3], 0
    // Predicated region
    $region2: #{mlp_bn_forward.1} parent=1 // pred_check
      _
    $region3: #{mlp_bn_forward.1} parent=1 // pred_check_branch
      %14 = sbr.rel (0) target = $region5
    $region4: #{mlp_bn_forward.1} parent=1 // pred_region
      _
    $region5: #{mlp_bn_forward.1} parent=1 // pred_fallthru
      _
    // Predicated region
    $region6: #{mlp_bn_forward.1} parent=1 // pred_check
      _
    $region7: #{mlp_bn_forward.1} parent=1 // pred_check_branch
      %16 = sbr.rel (0) target = $region9
    $region8: #{mlp_bn_forward.1} parent=1 // pred_region
      _
    $region9: #{mlp_bn_forward.1} parent=1 // pred_fallthru
      _
    // Predicated region
    $region10: #{mlp_bn_forward.1} parent=1 // pred_check
      _
    $region11: #{mlp_bn_forward.1} parent=1 // pred_check_branch
      %18 = sbr.rel (0) target = $region13
    $region12: #{mlp_bn_forward.1} parent=1 // pred_region
      _
    $region13: #{mlp_bn_forward.1} parent=1 // pred_fallthru
      _
    // Predicated region
    $region14: #{mlp_bn_forward.1} parent=1 // pred_check
      _
    $region15: #{mlp_bn_forward.1} parent=1 // pred_check_branch
      %20 = sbr.rel (0) target = $region17
    $region16: #{mlp_bn_forward.1} parent=1 // pred_region
      _
    $region17: #{mlp_bn_forward.1} parent=1 // pred_fallthru
      _
    // Predicated region
    $region18: #{mlp_bn_forward.1} parent=1 // pred_check
      _
    $region19: #{mlp_bn_forward.1} parent=1 // pred_check_branch
      %22 = sbr.rel (0) target = $region21
    $region20: #{mlp_bn_forward.1} parent=1 // pred_region
      _
    $region21: #{mlp_bn_forward.1} parent=1 // pred_fallthru
      _
    // Predicated region
    $region22: #{mlp_bn_forward.1} parent=1 // pred_check
      _
    $region23: #{mlp_bn_forward.1} parent=1 // pred_check_branch
      %24 = sbr.rel (0) target = $region25
    $region24: #{mlp_bn_forward.1} parent=1 // pred_region
      _
    $region25: #{mlp_bn_forward.1} parent=1 // pred_fallthru
      _
    // Predicated region
    $region26: #{mlp_bn_forward.1} parent=1 // pred_check
      _
    $region27: #{mlp_bn_forward.1} parent=1 // pred_check_branch
      %26 = sbr.rel (0) target = $region29
    $region28: #{mlp_bn_forward.1} parent=1 // pred_region
      _
    $region29: #{mlp_bn_forward.1} parent=1 // pred_fallthru
      _
    %v27 = vld [vmem:[%s0] sm:$0xff]
    %v28 = vld [vmem:[%s0 + $0x8] sm:$0xff]
    %31 = vst [vmem:[#allocation1] ss:$4 sm:$0xff] %v27
    %s32 = scalar_lea.vmem [#allocation1], 32
    %33 = vst [vmem:[%s32] ss:$4 sm:$0xff] %v28
    %v34 = vld.sshfl [vmem:[#allocation1] sm:$0xff pattern:$0x73625140]
    %v35 = vld.sshfl [vmem:[#allocation1 + $0x8] sm:$0xff pattern:$0x73625140]
    %v36 = vld.sshfl [vmem:[#allocation1 + $0x10] sm:$0xff pattern:$0x73625140]
    %v37 = vld.sshfl [vmem:[#allocation1 + $0x18] sm:$0xff pattern:$0x73625140]
    %v38 = vld.sshfl [vmem:[#allocation1 + $0x20] sm:$0xff pattern:$0x73625140]
    %v39 = vld.sshfl [vmem:[#allocation1 + $0x28] sm:$0xff pattern:$0x73625140]
    %v40 = vld.sshfl [vmem:[#allocation1 + $0x30] sm:$0xff pattern:$0x73625140]
    %v41 = vld.sshfl [vmem:[#allocation1 + $0x38] sm:$0xff pattern:$0x73625140]
    %v50 = vpack.c.bf16 %v34, %v34
    %v51 = vpack.c.bf16 %v35, %v35
    %v52 = vpack.c.bf16 %v36, %v36
    %v53 = vpack.c.bf16 %v37, %v37
    %v54 = vpack.c.bf16 %v38, %v38
    %v55 = vpack.c.bf16 %v39, %v39
    %v56 = vpack.c.bf16 %v40, %v40
    %v57 = vpack.c.bf16 %v41, %v41
    %v58 = vld [vmem:[%s1] sm:$0xf]
    %v59 = vld [vmem:[%s1 + $0x4] sm:$0xf]
    %v60 = vld [vmem:[%s1 + $0x8] sm:$0xf]
    %v61 = vld [vmem:[%s1 + $0xc] sm:$0xf]
    %v62 = vld [vmem:[%s1 + $0x10] sm:$0xf]
    %v63 = vld [vmem:[%s1 + $0x14] sm:$0xf]
    %v64 = vld [vmem:[%s1 + $0x18] sm:$0xf]
    %v65 = vld [vmem:[%s1 + $0x1c] sm:$0xf]
    %v66 = vld [vmem:[%s1 + $0x20] sm:$0xf]
    %v67 = vld [vmem:[%s1 + $0x24] sm:$0xf]
    %v68 = vld [vmem:[%s1 + $0x28] sm:$0xf]
    %v69 = vld [vmem:[%s1 + $0x2c] sm:$0xf]
    %v70 = vld [vmem:[%s1 + $0x30] sm:$0xf]
    %v71 = vld [vmem:[%s1 + $0x34] sm:$0xf]
    %v72 = vld [vmem:[%s1 + $0x38] sm:$0xf]
    %v73 = vld [vmem:[%s1 + $0x3c] sm:$0xf]
    %v74 = vld [vmem:[%s1 + $0x40] sm:$0xf]
    %v75 = vld [vmem:[%s1 + $0x44] sm:$0xf]
    %v76 = vld [vmem:[%s1 + $0x48] sm:$0xf]
    %v77 = vld [vmem:[%s1 + $0x4c] sm:$0xf]
    %v78 = vld [vmem:[%s1 + $0x50] sm:$0xf]
    %v79 = vld [vmem:[%s1 + $0x54] sm:$0xf]
    %v80 = vld [vmem:[%s1 + $0x58] sm:$0xf]
    %v81 = vld [vmem:[%s1 + $0x5c] sm:$0xf]
    %v82 = vld [vmem:[%s1 + $0x60] sm:$0xf]
    %v83 = vld [vmem:[%s1 + $0x64] sm:$0xf]
    %v84 = vld [vmem:[%s1 + $0x68] sm:$0xf]
    %v85 = vld [vmem:[%s1 + $0x6c] sm:$0xf]
    %v86 = vld [vmem:[%s1 + $0x70] sm:$0xf]
    %v87 = vld [vmem:[%s1 + $0x74] sm:$0xf]
    %v88 = vld [vmem:[%s1 + $0x78] sm:$0xf]
    %v89 = vld [vmem:[%s1 + $0x7c] sm:$0xf]
    %v90 = vld [vmem:[%s1 + $0x80] sm:$0xf]
    %v91 = vld [vmem:[%s1 + $0x84] sm:$0xf]
    %v92 = vld [vmem:[%s1 + $0x88] sm:$0xf]
    %v93 = vld [vmem:[%s1 + $0x8c] sm:$0xf]
    %v94 = vld [vmem:[%s1 + $0x90] sm:$0xf]
    %v95 = vld [vmem:[%s1 + $0x94] sm:$0xf]
    %v96 = vld [vmem:[%s1 + $0x98] sm:$0xf]
    %v97 = vld [vmem:[%s1 + $0x9c] sm:$0xf]
    %v98 = vld [vmem:[%s1 + $0xa0] sm:$0xf]
    %v99 = vld [vmem:[%s1 + $0xa4] sm:$0xf]
    %v100 = vld [vmem:[%s1 + $0xa8] sm:$0xf]
    %v101 = vld [vmem:[%s1 + $0xac] sm:$0xf]
    %v102 = vld [vmem:[%s1 + $0xb0] sm:$0xf]
    %v103 = vld [vmem:[%s1 + $0xb4] sm:$0xf]
    %v104 = vld [vmem:[%s1 + $0xb8] sm:$0xf]
    %v105 = vld [vmem:[%s1 + $0xbc] sm:$0xf]
    %v106 = vld [vmem:[%s1 + $0xc0] sm:$0xf]
    %v107 = vld [vmem:[%s1 + $0xc4] sm:$0xf]
    %v108 = vld [vmem:[%s1 + $0xc8] sm:$0xf]
    %v109 = vld [vmem:[%s1 + $0xcc] sm:$0xf]
    %v110 = vld [vmem:[%s1 + $0xd0] sm:$0xf]
    %v111 = vld [vmem:[%s1 + $0xd4] sm:$0xf]
    %v112 = vld [vmem:[%s1 + $0xd8] sm:$0xf]
    %v113 = vld [vmem:[%s1 + $0xdc] sm:$0xf]
    %v114 = vld [vmem:[%s1 + $0xe0] sm:$0xf]
    %v115 = vld [vmem:[%s1 + $0xe4] sm:$0xf]
    %v116 = vld [vmem:[%s1 + $0xe8] sm:$0xf]
    %v117 = vld [vmem:[%s1 + $0xec] sm:$0xf]
    %v118 = vld [vmem:[%s1 + $0xf0] sm:$0xf]
    %v119 = vld [vmem:[%s1 + $0xf4] sm:$0xf]
    %v120 = vld [vmem:[%s1 + $0xf8] sm:$0xf]
    %v121 = vld [vmem:[%s1 + $0xfc] sm:$0xf]
    %v122 = vld [vmem:[%s1 + $0x100] sm:$0xf]
    %v123 = vld [vmem:[%s1 + $0x104] sm:$0xf]
    %v124 = vld [vmem:[%s1 + $0x108] sm:$0xf]
    %v125 = vld [vmem:[%s1 + $0x10c] sm:$0xf]
    %v126 = vld [vmem:[%s1 + $0x110] sm:$0xf]
    %v127 = vld [vmem:[%s1 + $0x114] sm:$0xf]
    %v128 = vld [vmem:[%s1 + $0x118] sm:$0xf]
    %v129 = vld [vmem:[%s1 + $0x11c] sm:$0xf]
    %v130 = vld [vmem:[%s1 + $0x120] sm:$0xf]
    %v131 = vld [vmem:[%s1 + $0x124] sm:$0xf]
    %v132 = vld [vmem:[%s1 + $0x128] sm:$0xf]
    %v133 = vld [vmem:[%s1 + $0x12c] sm:$0xf]
    %v134 = vld [vmem:[%s1 + $0x130] sm:$0xf]
    %v135 = vld [vmem:[%s1 + $0x134] sm:$0xf]
    %v136 = vld [vmem:[%s1 + $0x138] sm:$0xf]
    %v137 = vld [vmem:[%s1 + $0x13c] sm:$0xf]
    %v138 = vld [vmem:[%s1 + $0x140] sm:$0xf]
    %v139 = vld [vmem:[%s1 + $0x144] sm:$0xf]
    %v140 = vld [vmem:[%s1 + $0x148] sm:$0xf]
    %v141 = vld [vmem:[%s1 + $0x14c] sm:$0xf]
    %v142 = vld [vmem:[%s1 + $0x150] sm:$0xf]
    %v143 = vld [vmem:[%s1 + $0x154] sm:$0xf]
    %v144 = vld [vmem:[%s1 + $0x158] sm:$0xf]
    %v145 = vld [vmem:[%s1 + $0x15c] sm:$0xf]
    %v146 = vld [vmem:[%s1 + $0x160] sm:$0xf]
    %v147 = vld [vmem:[%s1 + $0x164] sm:$0xf]
    %v148 = vld [vmem:[%s1 + $0x168] sm:$0xf]
    %v149 = vld [vmem:[%s1 + $0x16c] sm:$0xf]
    %v150 = vld [vmem:[%s1 + $0x170] sm:$0xf]
    %v151 = vld [vmem:[%s1 + $0x174] sm:$0xf]
    %v152 = vld [vmem:[%s1 + $0x178] sm:$0xf]
    %v153 = vld [vmem:[%s1 + $0x17c] sm:$0xf]
    %v154 = vld [vmem:[%s1 + $0x180] sm:$0xf]
    %v155 = vld [vmem:[%s1 + $0x184] sm:$0xf]
    %v156 = vld [vmem:[%s1 + $0x188] sm:$0xf]
    %v157 = vld [vmem:[%s1 + $0x18c] sm:$0xf]
    %v158 = vld [vmem:[%s1 + $0x190] sm:$0xf]
    %v159 = vld [vmem:[%s1 + $0x194] sm:$0xf]
    %v160 = vld [vmem:[%s1 + $0x198] sm:$0xf]
    %v161 = vld [vmem:[%s1 + $0x19c] sm:$0xf]
    %v162 = vld [vmem:[%s1 + $0x1a0] sm:$0xf]
    %v163 = vld [vmem:[%s1 + $0x1a4] sm:$0xf]
    %v164 = vld [vmem:[%s1 + $0x1a8] sm:$0xf]
    %v165 = vld [vmem:[%s1 + $0x1ac] sm:$0xf]
    %v166 = vld [vmem:[%s1 + $0x1b0] sm:$0xf]
    %v167 = vld [vmem:[%s1 + $0x1b4] sm:$0xf]
    %v168 = vld [vmem:[%s1 + $0x1b8] sm:$0xf]
    %v169 = vld [vmem:[%s1 + $0x1bc] sm:$0xf]
    %v170 = vld [vmem:[%s1 + $0x1c0] sm:$0xf]
    %v171 = vld [vmem:[%s1 + $0x1c4] sm:$0xf]
    %v172 = vld [vmem:[%s1 + $0x1c8] sm:$0xf]
    %v173 = vld [vmem:[%s1 + $0x1cc] sm:$0xf]
    %v174 = vld [vmem:[%s1 + $0x1d0] sm:$0xf]
    %v175 = vld [vmem:[%s1 + $0x1d4] sm:$0xf]
    %v176 = vld [vmem:[%s1 + $0x1d8] sm:$0xf]
    %v177 = vld [vmem:[%s1 + $0x1dc] sm:$0xf]
    %v178 = vld [vmem:[%s1 + $0x1e0] sm:$0xf]
    %v179 = vld [vmem:[%s1 + $0x1e4] sm:$0xf]
    %v180 = vld [vmem:[%s1 + $0x1e8] sm:$0xf]
    %v181 = vld [vmem:[%s1 + $0x1ec] sm:$0xf]
    %v182 = vld [vmem:[%s1 + $0x1f0] sm:$0xf]
    %v183 = vld [vmem:[%s1 + $0x1f4] sm:$0xf]
    %v184 = vld [vmem:[%s1 + $0x1f8] sm:$0xf]
    %v185 = vld [vmem:[%s1 + $0x1fc] sm:$0xf]
    %v186 = vld [vmem:[%s2] sm:$0x1]
    %v188 = vperm.slane %v186, 0
    %v318 = vunpack.c.l.b16 %v58
    %v319 = vunpack.c.l.b16 %v59
    %v320 = vunpack.c.l.b16 %v60
    %v321 = vunpack.c.l.b16 %v61
    %v322 = vunpack.c.l.b16 %v62
    %v323 = vunpack.c.l.b16 %v63
    %v324 = vunpack.c.l.b16 %v64
    %v325 = vunpack.c.l.b16 %v65
    %v326 = vunpack.c.l.b16 %v66
    %v327 = vunpack.c.l.b16 %v67
    %v328 = vunpack.c.l.b16 %v68
    %v329 = vunpack.c.l.b16 %v69
    %v330 = vunpack.c.l.b16 %v70
    %v331 = vunpack.c.l.b16 %v71
    %v332 = vunpack.c.l.b16 %v72
    %v333 = vunpack.c.l.b16 %v73
    %v334 = vunpack.c.l.b16 %v74
    %v335 = vunpack.c.l.b16 %v75
    %v336 = vunpack.c.l.b16 %v76
    %v337 = vunpack.c.l.b16 %v77
    %v338 = vunpack.c.l.b16 %v78
    %v339 = vunpack.c.l.b16 %v79
    %v340 = vunpack.c.l.b16 %v80
    %v341 = vunpack.c.l.b16 %v81
    %v342 = vunpack.c.l.b16 %v82
    %v343 = vunpack.c.l.b16 %v83
    %v344 = vunpack.c.l.b16 %v84
    %v345 = vunpack.c.l.b16 %v85
    %v346 = vunpack.c.l.b16 %v86
    %v347 = vunpack.c.l.b16 %v87
    %v348 = vunpack.c.l.b16 %v88
    %v349 = vunpack.c.l.b16 %v89
    %v350 = vunpack.c.l.b16 %v90
    %v351 = vunpack.c.l.b16 %v91
    %v352 = vunpack.c.l.b16 %v92
    %v353 = vunpack.c.l.b16 %v93
    %v354 = vunpack.c.l.b16 %v94
    %v355 = vunpack.c.l.b16 %v95
    %v356 = vunpack.c.l.b16 %v96
    %v357 = vunpack.c.l.b16 %v97
    %v358 = vunpack.c.l.b16 %v98
    %v359 = vunpack.c.l.b16 %v99
    %v360 = vunpack.c.l.b16 %v100
    %v361 = vunpack.c.l.b16 %v101
    %v362 = vunpack.c.l.b16 %v102
    %v363 = vunpack.c.l.b16 %v103
    %v364 = vunpack.c.l.b16 %v104
    %v365 = vunpack.c.l.b16 %v105
    %v366 = vunpack.c.l.b16 %v106
    %v367 = vunpack.c.l.b16 %v107
    %v368 = vunpack.c.l.b16 %v108
    %v369 = vunpack.c.l.b16 %v109
    %v370 = vunpack.c.l.b16 %v110
    %v371 = vunpack.c.l.b16 %v111
    %v372 = vunpack.c.l.b16 %v112
    %v373 = vunpack.c.l.b16 %v113
    %v374 = vunpack.c.l.b16 %v114
    %v375 = vunpack.c.l.b16 %v115
    %v376 = vunpack.c.l.b16 %v116
    %v377 = vunpack.c.l.b16 %v117
    %v378 = vunpack.c.l.b16 %v118
    %v379 = vunpack.c.l.b16 %v119
    %v380 = vunpack.c.l.b16 %v120
    %v381 = vunpack.c.l.b16 %v121
    %v382 = vunpack.c.l.b16 %v122
    %v383 = vunpack.c.l.b16 %v123
    %v384 = vunpack.c.l.b16 %v124
    %v385 = vunpack.c.l.b16 %v125
    %v386 = vunpack.c.l.b16 %v126
    %v387 = vunpack.c.l.b16 %v127
    %v388 = vunpack.c.l.b16 %v128
    %v389 = vunpack.c.l.b16 %v129
    %v390 = vunpack.c.l.b16 %v130
    %v391 = vunpack.c.l.b16 %v131
    %v392 = vunpack.c.l.b16 %v132
    %v393 = vunpack.c.l.b16 %v133
    %v394 = vunpack.c.l.b16 %v134
    %v395 = vunpack.c.l.b16 %v135
    %v396 = vunpack.c.l.b16 %v136
    %v397 = vunpack.c.l.b16 %v137
    %v398 = vunpack.c.l.b16 %v138
    %v399 = vunpack.c.l.b16 %v139
    %v400 = vunpack.c.l.b16 %v140
    %v401 = vunpack.c.l.b16 %v141
    %v402 = vunpack.c.l.b16 %v142
    %v403 = vunpack.c.l.b16 %v143
    %v404 = vunpack.c.l.b16 %v144
    %v405 = vunpack.c.l.b16 %v145
    %v406 = vunpack.c.l.b16 %v146
    %v407 = vunpack.c.l.b16 %v147
    %v408 = vunpack.c.l.b16 %v148
    %v409 = vunpack.c.l.b16 %v149
    %v410 = vunpack.c.l.b16 %v150
    %v411 = vunpack.c.l.b16 %v151
    %v412 = vunpack.c.l.b16 %v152
    %v413 = vunpack.c.l.b16 %v153
    %v414 = vunpack.c.l.b16 %v154
    %v415 = vunpack.c.l.b16 %v155
    %v416 = vunpack.c.l.b16 %v156
    %v417 = vunpack.c.l.b16 %v157
    %v418 = vunpack.c.l.b16 %v158
    %v419 = vunpack.c.l.b16 %v159
    %v420 = vunpack.c.l.b16 %v160
    %v421 = vunpack.c.l.b16 %v161
    %v422 = vunpack.c.l.b16 %v162
    %v423 = vunpack.c.l.b16 %v163
    %v424 = vunpack.c.l.b16 %v164
    %v425 = vunpack.c.l.b16 %v165
    %v426 = vunpack.c.l.b16 %v166
    %v427 = vunpack.c.l.b16 %v167
    %v428 = vunpack.c.l.b16 %v168
    %v429 = vunpack.c.l.b16 %v169
    %v430 = vunpack.c.l.b16 %v170
    %v431 = vunpack.c.l.b16 %v171
    %v432 = vunpack.c.l.b16 %v172
    %v433 = vunpack.c.l.b16 %v173
    %v434 = vunpack.c.l.b16 %v174
    %v435 = vunpack.c.l.b16 %v175
    %v436 = vunpack.c.l.b16 %v176
    %v437 = vunpack.c.l.b16 %v177
    %v438 = vunpack.c.l.b16 %v178
    %v439 = vunpack.c.l.b16 %v179
    %v440 = vunpack.c.l.b16 %v180
    %v441 = vunpack.c.l.b16 %v181
    %v442 = vunpack.c.l.b16 %v182
    %v443 = vunpack.c.l.b16 %v183
    %v444 = vunpack.c.l.b16 %v184
    %v445 = vunpack.c.l.b16 %v185
    %v446 = vpack.c.b16 %v319, %v318
    %v447 = vpack.c.b16 %v321, %v320
    %v448 = vpack.c.b16 %v323, %v322
    %v449 = vpack.c.b16 %v325, %v324
    %v450 = vpack.c.b16 %v327, %v326
    %v451 = vpack.c.b16 %v329, %v328
    %v452 = vpack.c.b16 %v331, %v330
    %v453 = vpack.c.b16 %v333, %v332
    %v454 = vpack.c.b16 %v335, %v334
    %v455 = vpack.c.b16 %v337, %v336
    %v456 = vpack.c.b16 %v339, %v338
    %v457 = vpack.c.b16 %v341, %v340
    %v458 = vpack.c.b16 %v343, %v342
    %v459 = vpack.c.b16 %v345, %v344
    %v460 = vpack.c.b16 %v347, %v346
    %v461 = vpack.c.b16 %v349, %v348
    %v462 = vpack.c.b16 %v351, %v350
    %v463 = vpack.c.b16 %v353, %v352
    %v464 = vpack.c.b16 %v355, %v354
    %v465 = vpack.c.b16 %v357, %v356
    %v466 = vpack.c.b16 %v359, %v358
    %v467 = vpack.c.b16 %v361, %v360
    %v468 = vpack.c.b16 %v363, %v362
    %v469 = vpack.c.b16 %v365, %v364
    %v470 = vpack.c.b16 %v367, %v366
    %v471 = vpack.c.b16 %v369, %v368
    %v472 = vpack.c.b16 %v371, %v370
    %v473 = vpack.c.b16 %v373, %v372
    %v474 = vpack.c.b16 %v375, %v374
    %v475 = vpack.c.b16 %v377, %v376
    %v476 = vpack.c.b16 %v379, %v378
    %v477 = vpack.c.b16 %v381, %v380
    %v478 = vpack.c.b16 %v383, %v382
    %v479 = vpack.c.b16 %v385, %v384
    %v480 = vpack.c.b16 %v387, %v386
    %v481 = vpack.c.b16 %v389, %v388
    %v482 = vpack.c.b16 %v391, %v390
    %v483 = vpack.c.b16 %v393, %v392
    %v484 = vpack.c.b16 %v395, %v394
    %v485 = vpack.c.b16 %v397, %v396
    %v486 = vpack.c.b16 %v399, %v398
    %v487 = vpack.c.b16 %v401, %v400
    %v488 = vpack.c.b16 %v403, %v402
    %v489 = vpack.c.b16 %v405, %v404
    %v490 = vpack.c.b16 %v407, %v406
    %v491 = vpack.c.b16 %v409, %v408
    %v492 = vpack.c.b16 %v411, %v410
    %v493 = vpack.c.b16 %v413, %v412
    %v494 = vpack.c.b16 %v415, %v414
    %v495 = vpack.c.b16 %v417, %v416
    %v496 = vpack.c.b16 %v419, %v418
    %v497 = vpack.c.b16 %v421, %v420
    %v498 = vpack.c.b16 %v423, %v422
    %v499 = vpack.c.b16 %v425, %v424
    %v500 = vpack.c.b16 %v427, %v426
    %v501 = vpack.c.b16 %v429, %v428
    %v502 = vpack.c.b16 %v431, %v430
    %v503 = vpack.c.b16 %v433, %v432
    %v504 = vpack.c.b16 %v435, %v434
    %v505 = vpack.c.b16 %v437, %v436
    %v506 = vpack.c.b16 %v439, %v438
    %v507 = vpack.c.b16 %v441, %v440
    %v508 = vpack.c.b16 %v443, %v442
    %v509 = vpack.c.b16 %v445, %v444
    %574 = vmatpush.bf16.msra.mxu0 %v453
    %575 = vmatpush.bf16.msra.mxu0 %v452
    %576 = vmatpush.bf16.msra.mxu0 %v451
    %577 = vmatpush.bf16.msra.mxu0 %v450
    %578 = vmatpush.bf16.msra.mxu0 %v449
    %579 = vmatpush.bf16.msra.mxu0 %v448
    %580 = vmatpush.bf16.msra.mxu0 %v447
    %581 = vmatpush.bf16.msra.mxu0 %v446
    %582 = vmatmul.bf16.gmra.mxu0 %v50
    %v583 = vpop.f32.mrf.mxu0
    %v584 = vadd.f32 %v188, %v583
    %v585 = vpop.f32.mrf.mxu0
    %586 = vdwg.mxu0
    %587 = vmatpush.bf16.msra.mxu0 %v461
    %588 = vmatpush.bf16.msra.mxu0 %v460
    %589 = vmatpush.bf16.msra.mxu0 %v459
    %590 = vmatpush.bf16.msra.mxu0 %v458
    %591 = vmatpush.bf16.msra.mxu0 %v457
    %592 = vmatpush.bf16.msra.mxu0 %v456
    %593 = vmatpush.bf16.msra.mxu0 %v455
    %594 = vmatpush.bf16.msra.mxu0 %v454
    %595 = vmatmul.bf16.gmra.mxu0 %v51
    %v596 = vpop.f32.mrf.mxu0
    %v597 = vadd.f32 %v584, %v596
    %v598 = vpop.f32.mrf.mxu0
    %599 = vdwg.mxu0
    %600 = vmatpush.bf16.msra.mxu0 %v469
    %601 = vmatpush.bf16.msra.mxu0 %v468
    %602 = vmatpush.bf16.msra.mxu0 %v467
    %603 = vmatpush.bf16.msra.mxu0 %v466
    %604 = vmatpush.bf16.msra.mxu0 %v465
    %605 = vmatpush.bf16.msra.mxu0 %v464
    %606 = vmatpush.bf16.msra.mxu0 %v463
    %607 = vmatpush.bf16.msra.mxu0 %v462
    %608 = vmatmul.bf16.gmra.mxu0 %v52
    %v609 = vpop.f32.mrf.mxu0
    %v610 = vadd.f32 %v597, %v609
    %v611 = vpop.f32.mrf.mxu0
    %612 = vdwg.mxu0
    %613 = vmatpush.bf16.msra.mxu0 %v477
    %614 = vmatpush.bf16.msra.mxu0 %v476
    %615 = vmatpush.bf16.msra.mxu0 %v475
    %616 = vmatpush.bf16.msra.mxu0 %v474
    %617 = vmatpush.bf16.msra.mxu0 %v473
    %618 = vmatpush.bf16.msra.mxu0 %v472
    %619 = vmatpush.bf16.msra.mxu0 %v471
    %620 = vmatpush.bf16.msra.mxu0 %v470
    %621 = vmatmul.bf16.gmra.mxu0 %v53
    %v622 = vpop.f32.mrf.mxu0
    %v623 = vadd.f32 %v610, %v622
    %v624 = vpop.f32.mrf.mxu0
    %625 = vdwg.mxu0
    %626 = vmatpush.bf16.msra.mxu0 %v485
    %627 = vmatpush.bf16.msra.mxu0 %v484
    %628 = vmatpush.bf16.msra.mxu0 %v483
    %629 = vmatpush.bf16.msra.mxu0 %v482
    %630 = vmatpush.bf16.msra.mxu0 %v481
    %631 = vmatpush.bf16.msra.mxu0 %v480
    %632 = vmatpush.bf16.msra.mxu0 %v479
    %633 = vmatpush.bf16.msra.mxu0 %v478
    %634 = vmatmul.bf16.gmra.mxu0 %v54
    %v635 = vpop.f32.mrf.mxu0
    %v636 = vadd.f32 %v623, %v635
    %v637 = vpop.f32.mrf.mxu0
    %638 = vdwg.mxu0
    %639 = vmatpush.bf16.msra.mxu0 %v493
    %640 = vmatpush.bf16.msra.mxu0 %v492
    %641 = vmatpush.bf16.msra.mxu0 %v491
    %642 = vmatpush.bf16.msra.mxu0 %v490
    %643 = vmatpush.bf16.msra.mxu0 %v489
    %644 = vmatpush.bf16.msra.mxu0 %v488
    %645 = vmatpush.bf16.msra.mxu0 %v487
    %646 = vmatpush.bf16.msra.mxu0 %v486
    %647 = vmatmul.bf16.gmra.mxu0 %v55
    %v648 = vpop.f32.mrf.mxu0
    %v649 = vadd.f32 %v636, %v648
    %v650 = vpop.f32.mrf.mxu0
    %651 = vdwg.mxu0
    %652 = vmatpush.bf16.msra.mxu0 %v501
    %653 = vmatpush.bf16.msra.mxu0 %v500
    %654 = vmatpush.bf16.msra.mxu0 %v499
    %655 = vmatpush.bf16.msra.mxu0 %v498
    %656 = vmatpush.bf16.msra.mxu0 %v497
    %657 = vmatpush.bf16.msra.mxu0 %v496
    %658 = vmatpush.bf16.msra.mxu0 %v495
    %659 = vmatpush.bf16.msra.mxu0 %v494
    %660 = vmatmul.bf16.gmra.mxu0 %v56
    %v661 = vpop.f32.mrf.mxu0
    %v662 = vadd.f32 %v649, %v661
    %v663 = vpop.f32.mrf.mxu0
    %664 = vdwg.mxu0
    %665 = vmatpush.bf16.msra.mxu0 %v509
    %666 = vmatpush.bf16.msra.mxu0 %v508
    %667 = vmatpush.bf16.msra.mxu0 %v507
    %668 = vmatpush.bf16.msra.mxu0 %v506
    %669 = vmatpush.bf16.msra.mxu0 %v505
    %670 = vmatpush.bf16.msra.mxu0 %v504
    %671 = vmatpush.bf16.msra.mxu0 %v503
    %672 = vmatpush.bf16.msra.mxu0 %v502
    %673 = vmatmul.bf16.gmra.mxu0 %v57
    %v674 = vpop.f32.mrf.mxu0
    %v675 = vadd.f32 %v662, %v674
    %v676 = vpop.f32.mrf.mxu0
    %677 = vdwg.mxu0
    %v678 = vmax.f32 %v675, 0.0
    %v679 = vld [vmem:[%s3] sm:$0xff]
    %v680 = vld [vmem:[%s3 + $0x8] sm:$0xff]
    %v681 = vld [vmem:[%s3 + $0x10] sm:$0xff]
    %v682 = vld [vmem:[%s3 + $0x18] sm:$0xff]
    %v683 = vld [vmem:[%s3 + $0x20] sm:$0xff]
    %v684 = vld [vmem:[%s3 + $0x28] sm:$0xff]
    %v685 = vld [vmem:[%s3 + $0x30] sm:$0xff]
    %v686 = vld [vmem:[%s3 + $0x38] sm:$0xff]
    %v687 = vld [vmem:[%s4] sm:$0x1]
    %v689 = vperm.slane %v687, 0
    %vm691 = vcmask 523264
    %v693 = vsel %vm691, %v678, 0
    %695 = vmatpush.msra.mxu0 0.0
    %696 = vmatpush.msra.mxu0 0.0
    %697 = vmatpush.msra.mxu0 0.0
    %698 = vmatpush.msra.mxu0 0.0
    %699 = vmatpush.msra.mxu0 0.0
    %700 = vmatpush.msra.mxu0 0.0
    %701 = vmatpush.msra.mxu0 0.0
    %702 = vmatpush.msra.mxu0 0.0
    %703 = vmatpush.msra.mxu0 %v686
    %704 = vmatpush.msra.mxu0 %v685
    %705 = vmatpush.msra.mxu0 %v684
    %706 = vmatpush.msra.mxu0 %v683
    %707 = vmatpush.msra.mxu0 %v682
    %708 = vmatpush.msra.mxu0 %v681
    %709 = vmatpush.msra.mxu0 %v680
    %710 = vmatpush.msra.mxu0 %v679
    %711 = vmatmul.f32.gmra.mxu0 %v693
    %v712 = vpop.f32.mrf.mxu0
    %v713 = vadd.f32 %v689, %v712
    %714 = vdwg.mxu0
    %v715 = vmax.f32 %v713, 0.0
    %v716 = vld [vmem:[%s5] sm:$0xff]
    %v717 = vld [vmem:[%s5 + $0x8] sm:$0xff]
    %v718 = vld [vmem:[%s5 + $0x10] sm:$0xff]
    %v719 = vld [vmem:[%s5 + $0x18] sm:$0xff]
    %v720 = vld [vmem:[%s6] sm:$0x1]
    %v722 = vperm.slane %v720, 0
    %vm724 = vcmask 261120
    %v726 = vsel %vm724, %v715, 0
    %728 = vmatpush.msra.mxu0 0.0
    %729 = vmatpush.msra.mxu0 0.0
    %730 = vmatpush.msra.mxu0 0.0
    %731 = vmatpush.msra.mxu0 0.0
    %732 = vmatpush.msra.mxu0 0.0
    %733 = vmatpush.msra.mxu0 0.0
    %734 = vmatpush.msra.mxu0 0.0
    %735 = vmatpush.msra.mxu0 0.0
    %736 = vmatpush.msra.mxu0 0.0
    %737 = vmatpush.msra.mxu0 0.0
    %738 = vmatpush.msra.mxu0 0.0
    %739 = vmatpush.msra.mxu0 0.0
    %740 = vmatpush.msra.mxu0 %v719
    %741 = vmatpush.msra.mxu0 %v718
    %742 = vmatpush.msra.mxu0 %v717
    %743 = vmatpush.msra.mxu0 %v716
    %744 = vmatmul.f32.gmra.mxu0 %v726
    %v745 = vpop.f32.mrf.mxu0
    %v746 = vadd.f32 %v722, %v745
    %747 = vdwg.mxu0
    %vm748 = vcmask 74752
    %749 = vst.msk [vmem:[#allocation2] sm:$0x3] %vm748, %v746
    // Predicated region
    $region30: #{mlp_bn_forward.1} parent=1 // pred_check
      _
    $region31: #{mlp_bn_forward.1} parent=1 // pred_check_branch
      %751 = sbr.rel (0) target = $region33
    $region32: #{mlp_bn_forward.1} parent=1 // pred_region
      %753 = vsyncadd [#allocation3], 0
      %s755 = sshll.u32 [#allocation2], 4
      %s756 = int_to_ptr.vmem [resolvable:$true] %s755
      %s757 = sshll.u32 %s7, 4
      %s758 = int_to_ptr.hbm [resolvable:$true] %s757
      %760 = dma.vmem_to_hbm [thread:$0]  %s756, 32, %s758, [#allocation3]
    $region33: #{mlp_bn_forward.1} parent=1 // pred_fallthru
      _
    // Predicated region
    $region34: #{mlp_bn_forward.1} parent=1 // pred_check
      _
    $region35: #{mlp_bn_forward.1} parent=1 // pred_check_branch
      %762 = sbr.rel (0) target = $region37
    $region36: #{mlp_bn_forward.1} parent=1 // pred_region
      %764 = dma.done [#allocation3], 32
    $region37: #{mlp_bn_forward.1} parent=1 // pred_fallthru
      _
    %765 = vsyncpa [#allocation3], 1

</llo_original>
